<compile_context>
chip_gen: v6e
topology: v6e:2x2x1
jax: 0.10.0
libtpu: 0.0.40
codegen_flags: <defaults>
</compile_context>

<pallas_src>
import functools

import jax
import jax.numpy as jnp
from jax import lax
from jax.experimental import pallas as pl
from jax.experimental.pallas import tpu as pltpu

_NEG_BIG = -1e30                       # finite "masked" value (avoids -inf NaNs)
_VMEM_BUDGET = 36 * 1024 * 1024        # target for tile-size search (v7x-safe)
_VMEM_LIMIT = 48 * 1024 * 1024         # scoped VMEM limit (< v7x 64 MiB physical)
# On v5e / v6e (128 MiB VMEM) both constants can be raised toward ~96 MiB for
# larger tiles; kept conservative here so one binary runs on every generation.


def _round_up(x, m):
    return (x + m - 1) // m * m


def _divisor_candidates(dim, candidates):
    c = [t for t in candidates if t <= dim and dim % t == 0]
    return c if c else [dim]


def _linear_tiles(M, N, K, in_bytes, out_bytes, n_mats):
    """Largest (tm, tn, tk) whose estimated (double-buffered) VMEM fits the budget."""
    tm_c = _divisor_candidates(M, (512, 256, 128))
    tn_c = _divisor_candidates(N, (512, 256, 128))
    tk_c = _divisor_candidates(K, (1024, 512, 256, 128))

    def est(tm, tn, tk):
        dbuf = 2 * (tm * tk * in_bytes
                    + n_mats * (tk * tn * in_bytes + tn * 4 + tm * tn * out_bytes))
        return dbuf + n_mats * tm * tn * 4          # f32 accumulators

    for tm in tm_c:
        for tn in tn_c:
            for tk in tk_c:
                if est(tm, tn, tk) <= _VMEM_BUDGET:
                    return tm, tn, tk
    return tm_c[-1], tn_c[-1], tk_c[-1]


def _attn_tiles(Lq, Lk, HD, num_heads, head_dim, in_bytes, out_bytes):
    tq_c = _divisor_candidates(Lq, (512, 256, 128))
    tkv_c = _divisor_candidates(Lk, (1024, 512, 256, 128))
    d_pad = max(_round_up(head_dim, 128), 128)       # lane padding of f32 scratch

    def est(tq, tkv):
        dbuf = 2 * (tq * HD * in_bytes + 2 * tkv * HD * in_bytes
                    + tkv + tq * tkv                  # int8 kpm + attn_mask tiles
                    + tq * HD * out_bytes)
        scratch = num_heads * tq * 128 * 4 * 2 + num_heads * tq * d_pad * 4
        return dbuf + scratch

    for tq in tq_c:
        for tkv in tkv_c:
            if est(tq, tkv) <= _VMEM_BUDGET:
                return tq, tkv
    return tq_c[-1], tkv_c[-1]


# --------------------------------------------------------------------------
# Generic tiled linear projection: out = x @ w_t + b
#   x: [M, K] compute dtype, w_t: [K, N] compute dtype, b: [1, N] f32.
# --------------------------------------------------------------------------
def linear_kernel(x_ref, w_ref, b_ref, o_ref, acc_ref):
    @pl.when(pl.program_id(2) == 0)
    def _():
        acc_ref[...] = jnp.zeros_like(acc_ref)

    acc_ref[...] += jnp.dot(x_ref[...], w_ref[...],
                            preferred_element_type=jnp.float32)

    @pl.when(pl.program_id(2) == pl.num_programs(2) - 1)
    def _():
        o_ref[...] = (acc_ref[...] + b_ref[...]).astype(o_ref.dtype)


def pallas_linear(x2d, w_t, b, out_dtype):
    M, K = x2d.shape
    N = w_t.shape[1]
    tm, tn, tk = _linear_tiles(M, N, K, jnp.dtype(x2d.dtype).itemsize,
                               jnp.dtype(out_dtype).itemsize, n_mats=1)
    b2 = b.reshape(1, N).astype(jnp.float32)
    return pl.pallas_call(
        linear_kernel,
        out_shape=jax.ShapeDtypeStruct((M, N), out_dtype),
        grid=(M // tm, N // tn, K // tk),
        in_specs=[
            pl.BlockSpec((tm, tk), lambda i, j, kc: (i, kc)),
            pl.BlockSpec((tk, tn), lambda i, j, kc: (kc, j)),
            pl.BlockSpec((1, tn), lambda i, j, kc: (0, j)),
        ],
        out_specs=pl.BlockSpec((tm, tn), lambda i, j, kc: (i, j)),
        scratch_shapes=[pltpu.VMEM((tm, tn), jnp.float32)],
        compiler_params=pltpu.CompilerParams(
            dimension_semantics=("parallel", "parallel", "arbitrary"),
            vmem_limit_bytes=_VMEM_LIMIT,
        ),
    )(x2d, w_t, b2)


# --------------------------------------------------------------------------
# Fused QKV projection for self-attention: x is read from HBM once,
# three matmuls share the same x tile (3x less activation HBM traffic).
# --------------------------------------------------------------------------
def qkv_fused_kernel(x_ref, wq_ref, wk_ref, wv_ref, bq_ref, bk_ref, bv_ref,
                     q_ref, k_ref, v_ref, accq, acck, accv):
    kc = pl.program_id(2)

    @pl.when(kc == 0)
    def _():
        accq[...] = jnp.zeros_like(accq)
        acck[...] = jnp.zeros_like(acck)
        accv[...] = jnp.zeros_like(accv)

    x = x_ref[...]
    accq[...] += jnp.dot(x, wq_ref[...], preferred_element_type=jnp.float32)
    acck[...] += jnp.dot(x, wk_ref[...], preferred_element_type=jnp.float32)
    accv[...] += jnp.dot(x, wv_ref[...], preferred_element_type=jnp.float32)

    @pl.when(kc == pl.num_programs(2) - 1)
    def _():
        q_ref[...] = (accq[...] + bq_ref[...]).astype(q_ref.dtype)
        k_ref[...] = (acck[...] + bk_ref[...]).astype(k_ref.dtype)
        v_ref[...] = (accv[...] + bv_ref[...]).astype(v_ref.dtype)


def pallas_qkv_fused(x2d, wq_t, wk_t, wv_t, bq, bk, bv, out_dtype):
    M, K = x2d.shape
    N = wq_t.shape[1]
    tm, tn, tk = _linear_tiles(M, N, K, jnp.dtype(x2d.dtype).itemsize,
                               jnp.dtype(out_dtype).itemsize, n_mats=3)

    def b2(b):
        return b.reshape(1, N).astype(jnp.float32)

    x_spec = pl.BlockSpec((tm, tk), lambda i, j, kc: (i, kc))
    w_spec = pl.BlockSpec((tk, tn), lambda i, j, kc: (kc, j))
    b_spec = pl.BlockSpec((1, tn), lambda i, j, kc: (0, j))
    o_spec = pl.BlockSpec((tm, tn), lambda i, j, kc: (i, j))
    out_sds = jax.ShapeDtypeStruct((M, N), out_dtype)

    return pl.pallas_call(
        qkv_fused_kernel,
        out_shape=(out_sds, out_sds, out_sds),
        grid=(M // tm, N // tn, K // tk),
        in_specs=[x_spec, w_spec, w_spec, w_spec, b_spec, b_spec, b_spec],
        out_specs=(o_spec, o_spec, o_spec),
        scratch_shapes=[pltpu.VMEM((tm, tn), jnp.float32) for _ in range(3)],
        compiler_params=pltpu.CompilerParams(
            dimension_semantics=("parallel", "parallel", "arbitrary"),
            vmem_limit_bytes=_VMEM_LIMIT,
        ),
    )(x2d, wq_t, wk_t, wv_t, b2(bq), b2(bk), b2(bv))


# --------------------------------------------------------------------------
# Flash-style multi-head attention.
#   Grid: (B, Lq//tq, Lk//tkv); kv axis is the online-softmax reduction.
#   q block (1,tq,H*D), k/v blocks (1,tkv,H*D), kpm (1,1,tkv) int8, am (tq,tkv) int8.
#   Scaling is already folded into the Q projection weights.
# --------------------------------------------------------------------------
def flash_mha_kernel(q_ref, k_ref, v_ref, kpm_ref, am_ref, o_ref,
                     m_ref, l_ref, acc_ref,
                     *, num_heads, head_dim, compute_dtype):
    kv = pl.program_id(2)

    @pl.when(kv == 0)
    def _():
        m_ref[...] = jnp.full_like(m_ref, _NEG_BIG)
        l_ref[...] = jnp.zeros_like(l_ref)
        acc_ref[...] = jnp.zeros_like(acc_ref)

    # Head-independent combined mask for this (q-tile, kv-tile): True = blocked.
    blocked = jnp.logical_or(kpm_ref[0] != 0, am_ref[...] != 0)      # (tq, tkv)

    q = q_ref[0]          # (tq,  H*D)
    k = k_ref[0]          # (tkv, H*D)
    v = v_ref[0]          # (tkv, H*D)

    # TODO(synk): for num_heads >= 8 with large tq/tkv, switch this static unroll to
    # a lax.fori_loop (or a head grid axis when head_dim % 128 == 0) to bound vreg
    # live ranges; at typical head counts the unroll is fine.
    for h in range(num_heads):
        lo = h * head_dim
        hi = lo + head_dim
        qh = q[:, lo:hi]                 # (tq,  D) (already scaled by d**-0.5)
        kh = k[:, lo:hi]                 # (tkv, D)
        vh = v[:, lo:hi]                 # (tkv, D)

        # (tq, D) x (tkv, D) contracting last dims -> (tq, tkv); no explicit k.T.
        s = lax.dot_general(qh, kh, (((1,), (1,)), ((), ())),
                            preferred_element_type=jnp.float32)
        s = jnp.where(blocked, _NEG_BIG, s)

        m_prev = m_ref[h]                                           # (tq, 1)
        m_new = jnp.maximum(m_prev, jnp.max(s, axis=-1, keepdims=True))
        alpha = jnp.exp(m_prev - m_new)
        p = jnp.exp(s - m_new)                                      # (tq, tkv) f32

        l_ref[h] = alpha * l_ref[h] + jnp.sum(p, axis=-1, keepdims=True)
        acc_ref[h] = alpha * acc_ref[h] + lax.dot_general(
            p.astype(compute_dtype), vh, (((1,), (0,)), ((), ())),
            preferred_element_type=jnp.float32)
        m_ref[h] = m_new

    @pl.when(kv == pl.num_programs(2) - 1)
    def _():
        # Assemble all heads in vregs, then ONE full-width lane-dense store.
        outs = []
        for h in range(num_heads):
            inv_l = pl.reciprocal(l_ref[h], approx=True)            # EUP slot
            outs.append(acc_ref[h] * inv_l)
        o_ref[0] = jnp.concatenate(outs, axis=-1).astype(o_ref.dtype)


def pallas_attention(q, k, v, kpm, am, *, num_heads, compute_dtype, out_dtype):
    # q: [B, Lq, H*D], k/v: [B, Lk, H*D] compute dtype
    # kpm: [B, 1, Lk] int8 (1 = blocked), am: [Lq, Lk] int8 (1 = blocked)
    B, Lq, HD = q.shape
    Lk = k.shape[1]
    head_dim = HD // num_heads
    tq, tkv = _attn_tiles(Lq, Lk, HD, num_heads, head_dim,
                          jnp.dtype(compute_dtype).itemsize,
                          jnp.dtype(out_dtype).itemsize)

    kernel = functools.partial(flash_mha_kernel, num_heads=num_heads,
                               head_dim=head_dim, compute_dtype=compute_dtype)
    return pl.pallas_call(
        kernel,
        out_shape=jax.ShapeDtypeStruct((B, Lq, HD), out_dtype),
        grid=(B, Lq // tq, Lk // tkv),
        in_specs=[
            pl.BlockSpec((1, tq, HD), lambda b, qi, kv: (b, qi, 0)),
            pl.BlockSpec((1, tkv, HD), lambda b, qi, kv: (b, kv, 0)),
            pl.BlockSpec((1, tkv, HD), lambda b, qi, kv: (b, kv, 0)),
            pl.BlockSpec((1, 1, tkv), lambda b, qi, kv: (b, 0, kv)),
            pl.BlockSpec((tq, tkv), lambda b, qi, kv: (qi, kv)),
        ],
        out_specs=pl.BlockSpec((1, tq, HD), lambda b, qi, kv: (b, qi, 0)),
        scratch_shapes=[
            pltpu.VMEM((num_heads, tq, 1), jnp.float32),             # m
            pltpu.VMEM((num_heads, tq, 1), jnp.float32),             # l
            pltpu.VMEM((num_heads, tq, head_dim), jnp.float32),      # acc
        ],
        compiler_params=pltpu.CompilerParams(
            dimension_semantics=("parallel", "parallel", "arbitrary"),
            vmem_limit_bytes=_VMEM_LIMIT,
        ),
    )(q, k, v, kpm, am)


# --------------------------------------------------------------------------
# MultiHeadAttention forward (eval mode: both dropouts are identity)
# --------------------------------------------------------------------------
class MultiHeadAttentionPallas:
    def __init__(self, hidden_size, num_heads, key, compute_dtype=jnp.bfloat16):
        assert hidden_size % num_heads == 0
        self.hidden_size = hidden_size
        self.num_heads = num_heads
        self.head_dim = hidden_size // num_heads
        self.scaling = self.head_dim ** (-0.5)
        self.compute_dtype = compute_dtype

        ks = jax.random.split(key, 8)
        bound = hidden_size ** (-0.5)

        def init_w(kk):  # PyTorch-style [out_features, in_features]
            return jax.random.uniform(
                kk, (hidden_size, hidden_size), jnp.float32, -bound, bound)

        def init_b(kk):
            return jax.random.uniform(kk, (hidden_size,), jnp.float32, -bound, bound)

        # f32 originals (used by the pure-JAX reference)
        self.wq, self.bq = init_w(ks[0]), init_b(ks[1])
        self.wk, self.bk = init_w(ks[2]), init_b(ks[3])
        self.wv, self.bv = init_w(ks[4]), init_b(ks[5])
        self.wo, self.bo = init_w(ks[6]), init_b(ks[7])

        # Pre-transposed / pre-cast weights; the attention scaling (d**-0.5) is
        # folded into the Q projection so the flash kernel never rescales scores.
        self.wq_t = (self.wq * self.scaling).T.astype(compute_dtype)
        self.wk_t = self.wk.T.astype(compute_dtype)
        self.wv_t = self.wv.T.astype(compute_dtype)
        self.wo_t = self.wo.T.astype(compute_dtype)
        self.bq_s = (self.bq * self.scaling).astype(jnp.float32)

    @staticmethod
    def _mask_inputs(key_padding_mask, attn_mask, B, Lq, Lk):
        # Small head-independent int8 mask tensors (1 = blocked): 4x less DMA than f32.
        if key_padding_mask is None:
            kpm = jnp.zeros((B, 1, Lk), jnp.int8)
        else:
            kpm = (key_padding_mask != 0).astype(jnp.int8).reshape(B, 1, Lk)
        if attn_mask is None:
            am = jnp.zeros((Lq, Lk), jnp.int8)
        else:
            am = (attn_mask != 0).astype(jnp.int8).reshape(Lq, Lk)
        return kpm, am

    def __call__(self, q, k, v, key_padding_mask=None, attn_mask=None):
        B, Lq, H = q.shape
        Lk = k.shape[1]
        cd = self.compute_dtype

        if (q is k) and (k is v):
            # Self-attention: fused QKV projection — x read from HBM once.
            x2d = q.reshape(B * Lq, H).astype(cd)
            qp, kp, vp = pallas_qkv_fused(x2d, self.wq_t, self.wk_t, self.wv_t,
                                          self.bq_s, self.bk, self.bv, out_dtype=cd)
            qp = qp.reshape(B, Lq, H)
            kp = kp.reshape(B, Lk, H)
            vp = vp.reshape(B, Lk, H)
        else:
            qp = pallas_linear(q.reshape(B * Lq, H).astype(cd),
                               self.wq_t, self.bq_s, cd).reshape(B, Lq, H)
            kp = pallas_linear(k.reshape(B * Lk, H).astype(cd),
                               self.wk_t, self.bk, cd).reshape(B, Lk, H)
            vp = pallas_linear(v.reshape(B * Lk, H).astype(cd),
                               self.wv_t, self.bv, cd).reshape(B, Lk, H)

        kpm, am = self._mask_inputs(key_padding_mask, attn_mask, B, Lq, Lk)

        attn = pallas_attention(qp, kp, vp, kpm, am,
                                num_heads=self.num_heads,
                                compute_dtype=cd, out_dtype=cd)   # [B, Lq, H*D] cd

        out = pallas_linear(attn.reshape(B * Lq, H), self.wo_t, self.bo,
                            jnp.float32).reshape(B, Lq, H)
        # TODO(synk): attention_dropout / hidden_dropout are identity in eval mode.
        return out


# --------------------------------------------------------------------------
# Pure-JAX reference (f32 throughout) for correctness checks
# --------------------------------------------------------------------------
def reference_forward(mha, q, k, v, key_padding_mask, attn_mask):
    def proj(x, w, b):
        return x @ w.T + b

    def split(x):
        B, L, _ = x.shape
        return x.reshape(B, L, mha.num_heads, mha.head_dim).transpose(0, 2, 1, 3)

    B, Lq, _ = q.shape
    Lk = k.shape[1]
    qh = split(proj(q, mha.wq, mha.bq))
    kh = split(proj(k, mha.wk, mha.bk))
    vh = split(proj(v, mha.wv, mha.bv))

    mask = jnp.zeros((B, mha.num_heads, Lq, Lk), bool)
    if key_padding_mask is not None:
        mask = jnp.logical_or(mask, key_padding_mask.astype(bool).reshape(B, 1, 1, Lk))
    if attn_mask is not None:
        mask = jnp.logical_or(mask, attn_mask.astype(bool).reshape(1, 1, Lq, Lk))

    s = jnp.einsum("bhqd,bhkd->bhqk", qh, kh) * mha.scaling
    s = jnp.where(mask, -jnp.inf, s)
    p = jax.nn.softmax(s, axis=-1)
    o = jnp.einsum("bhqk,bhkd->bhqd", p, vh)
    o = o.transpose(0, 2, 1, 3).reshape(B, Lq, mha.hidden_size)
    return o @ mha.wo.T + mha.bo


if __name__ == "__main__":
    B, L, HIDDEN, HEADS = 2, 8, 32, 4

    key = jax.random.PRNGKey(0)
    k_param, k_q, k_k, k_v = jax.random.split(key, 4)

    q = jax.random.normal(k_q, (B, L, HIDDEN), jnp.float32)
    k = jax.random.normal(k_k, (B, L, HIDDEN), jnp.float32)
    v = jax.random.normal(k_v, (B, L, HIDDEN), jnp.float32)

    # key padding mask: last 2 positions of batch 1 are padding (1 = masked)
    key_padding_mask = jnp.zeros((B, L), jnp.int32).at[1, -2:].set(1)
    # causal mask: 1 = masked (strictly upper triangular)
    attn_mask = jnp.triu(jnp.ones((L, L), jnp.int32), k=1)

    # --- f32 compute path, cross-attention (separate q/k/v projections) ---
    mha_f32 = MultiHeadAttentionPallas(HIDDEN, HEADS, k_param,
                                       compute_dtype=jnp.float32)
    out_f32 = jax.block_until_ready(
        mha_f32(q, k, v, key_padding_mask=key_padding_mask, attn_mask=attn_mask))
    ref = reference_forward(mha_f32, q, k, v, key_padding_mask, attn_mask)
    assert out_f32.shape == (B, L, HIDDEN)
    assert jnp.allclose(out_f32, ref, atol=2e-2, rtol=2e-2), "f32 cross-attn mismatch"

    # --- f32 compute path, self-attention (exercises the fused QKV kernel) ---
    out_self = jax.block_until_ready(
        mha_f32(q, q, q, key_padding_mask=key_padding_mask, attn_mask=attn_mask))
    ref_self = reference_forward(mha_f32, q, q, q, key_padding_mask, attn_mask)
    assert jnp.allclose(out_self, ref_self, atol=2e-2, rtol=2e-2), "f32 self-attn mismatch"

    # --- bf16 MXU-operand path (recommended on v5e/v6e/v7x; softmax/acc stay f32) ---
    mha_bf16 = MultiHeadAttentionPallas(HIDDEN, HEADS, k_param,
                                        compute_dtype=jnp.bfloat16)
    out_bf16 = jax.block_until_ready(
        mha_bf16(q, q, q, key_padding_mask=key_padding_mask, attn_mask=attn_mask))
    assert out_bf16.shape == (B, L, HIDDEN)
    assert jnp.allclose(out_bf16, ref_self, atol=8e-2, rtol=8e-2), "bf16 mismatch"

    print("KERNEL_OK")
</pallas_src>

<mosaic_0001>
module attributes {stable_mosaic.version = 11 : i64} {
  func.func @linear_kernel(%arg0: i32, %arg1: i32, %arg2: i32, %arg3: memref<16x32xf32, #tpu.memory_space<vmem>>, %arg4: memref<32x32xf32, #tpu.memory_space<vmem>>, %arg5: memref<1x32xf32, #tpu.memory_space<vmem>>, %arg6: memref<16x32xf32, #tpu.memory_space<vmem>>, %arg7: memref<16x32xf32, #tpu.memory_space<vmem>>) attributes {dimension_semantics = [#tpu.dimension_semantics<parallel>, #tpu.dimension_semantics<parallel>, #tpu.dimension_semantics<arbitrary>], iteration_bounds = array<i64: 1, 1, 1>, scalar_prefetch = 0 : i64, scratch_operands = 1 : i64, tpu.core_type = #tpu.core_type<tc>, window_params = [{transform_indices = @transform_0, window_bounds = array<i64: 16, 32>}, {transform_indices = @transform_1, window_bounds = array<i64: 32, 32>}, {transform_indices = @transform_2, window_bounds = array<i64: 1, 32>}, {transform_indices = @transform_3, window_bounds = array<i64: 16, 32>}]} {
    %c0_i32 = arith.constant 0 : i32
    %0 = arith.cmpi eq, %arg2, %c0_i32 : i32
    %1 = arith.extui %0 : i1 to i32
    %c0_i32_0 = arith.constant 0 : i32
    %2 = arith.cmpi ne, %1, %c0_i32_0 : i32
    scf.if %2 {
      %cst_10 = arith.constant 0.000000e+00 : f32
      %12 = vector.broadcast %cst_10 : f32 to vector<16x32xf32>
      %c0_11 = arith.constant 0 : index
      %c0_12 = arith.constant 0 : index
      %13 = vector.load %arg7[%c0_11, %c0_12] : memref<16x32xf32, #tpu.memory_space<vmem>>, vector<16x32xf32>
      tpu.vector_store %arg7[%c0_11, %c0_12], %12 {strides = array<i32>} : memref<16x32xf32, #tpu.memory_space<vmem>>, vector<16x32xf32>,
    } else {
    }
    %c0 = arith.constant 0 : index
    %c0_1 = arith.constant 0 : index
    %3 = vector.load %arg7[%c0, %c0_1] : memref<16x32xf32, #tpu.memory_space<vmem>>, vector<16x32xf32>
    %c0_2 = arith.constant 0 : index
    %c0_3 = arith.constant 0 : index
    %4 = vector.load %arg3[%c0_2, %c0_3] : memref<16x32xf32, #tpu.memory_space<vmem>>, vector<16x32xf32>
    %c0_4 = arith.constant 0 : index
    %c0_5 = arith.constant 0 : index
    %5 = vector.load %arg4[%c0_4, %c0_5] : memref<32x32xf32, #tpu.memory_space<vmem>>, vector<32x32xf32>
    %cst = arith.constant dense<0.000000e+00> : vector<16x32xf32>
    %6 = tpu.matmul %4, %5, %cst {dimension_numbers = #tpu.dot_dimension_numbers<[1], [0], [0], [1], [0, 0, 1, 1], [], []>} : vector<16x32xf32>, vector<32x32xf32>, vector<16x32xf32> -> vector<16x32xf32>
    %7 = arith.addf %3, %6 : vector<16x32xf32>
    %c0_6 = arith.constant 0 : index
    %c0_7 = arith.constant 0 : index
    %8 = vector.load %arg7[%c0_6, %c0_7] : memref<16x32xf32, #tpu.memory_space<vmem>>, vector<16x32xf32>
    tpu.vector_store %arg7[%c0_6, %c0_7], %7 {strides = array<i32>} : memref<16x32xf32, #tpu.memory_space<vmem>>, vector<16x32xf32>,
    %c0_i32_8 = arith.constant 0 : i32
    %9 = arith.cmpi eq, %arg2, %c0_i32_8 : i32
    %10 = arith.extui %9 : i1 to i32
    %c0_i32_9 = arith.constant 0 : i32
    %11 = arith.cmpi ne, %10, %c0_i32_9 : i32
    scf.if %11 {
      %c0_10 = arith.constant 0 : index
      %c0_11 = arith.constant 0 : index
      %12 = vector.load %arg7[%c0_10, %c0_11] : memref<16x32xf32, #tpu.memory_space<vmem>>, vector<16x32xf32>
      %c0_12 = arith.constant 0 : index
      %c0_13 = arith.constant 0 : index
      %13 = vector.load %arg5[%c0_12, %c0_13] : memref<1x32xf32, #tpu.memory_space<vmem>>, vector<1x32xf32>
      %14 = vector.broadcast %13 : vector<1x32xf32> to vector<16x32xf32>
      %15 = arith.addf %12, %14 : vector<16x32xf32>
      %c0_14 = arith.constant 0 : index
      %c0_15 = arith.constant 0 : index
      %16 = vector.load %arg6[%c0_14, %c0_15] : memref<16x32xf32, #tpu.memory_space<vmem>>, vector<16x32xf32>
      tpu.vector_store %arg6[%c0_14, %c0_15], %15 {strides = array<i32>} : memref<16x32xf32, #tpu.memory_space<vmem>>, vector<16x32xf32>,
    } else {
    }
    return
  }
  func.func @transform_0(%arg0: i32, %arg1: i32, %arg2: i32) -> (i32, i32) {
    %c0_i32 = arith.constant 0 : i32
    return %arg0, %arg2 : i32, i32
  }
  func.func @transform_1(%arg0: i32, %arg1: i32, %arg2: i32) -> (i32, i32) {
    %c0_i32 = arith.constant 0 : i32
    return %arg2, %arg1 : i32, i32
  }
  func.func @transform_2(%arg0: i32, %arg1: i32, %arg2: i32) -> (i32, i32) {
    %c0_i32 = arith.constant 0 : i32
    %c0_i32_0 = arith.constant 0 : i32
    return %c0_i32, %arg1 : i32, i32
  }
  func.func @transform_3(%arg0: i32, %arg1: i32, %arg2: i32) -> (i32, i32) {
    %c0_i32 = arith.constant 0 : i32
    return %arg0, %arg1 : i32, i32
  }
}

</mosaic_0001>

<llo_original>
// kernel: tpu_custom_call.1
$region0: #{tpu_custom_call.1}
  #allocation0 [shape = 'u32[]', space=smem, size = 0x4, offset = 0x4, fixed_abs, tag = 'smem constant byte address 0x4 - core index']
  #allocation1 [shape = 'u32[144,128]{1,0:T(1,128)}', space=vmem, size = 0x12000, scoped, tag = 'internal scratch']
  #allocation2 [shape = 'f32[16,32]{1,0:T(8,128)}', space=vmem, size = 0x2000, scoped, tag = 'scratch operand']
  %s0 = inlined_call_operand.hbm [shape: f32[16,32], index: 0, kind: input, shape index: {}]
  %s1 = inlined_call_operand.hbm [shape: f32[32,32], index: 1, kind: input, shape index: {}]
  %s2 = inlined_call_operand.vmem [shape: f32[1,32], index: 2, kind: input, shape index: {}]
  %s3 = inlined_call_operand.hbm [shape: f32[16,32], index: 3, kind: output, shape index: {}]
  %s4 = sld [smem:[#allocation0]]
  $region38: #{tpu_custom_call.1} parent=0
    _
  %s6 = ssub.s32 1, %s4
  %s7 = scalar_select 0, %s6, %s4
  $region1: #{tpu_custom_call.1} parent=0
    #allocation3 [shape = 'u8[8192]{0}', space=vmem, size = 0x2000, scoped, tag = 'input window, operand 0, single buffered']
    #allocation4 [shape = 's32[1]{0}', space=sflag, size = 0x4, scoped, tag = 'scoped memory for tpu_custom_call.1']
    #allocation5 [shape = 's32[1]{0}', space=sflag, size = 0x4, scoped, tag = 'scoped memory for tpu_custom_call.1']
    #allocation6 [shape = 'u8[16384]{0}', space=vmem, size = 0x4000, scoped, tag = 'input window, operand 1, single buffered']
    #allocation7 [shape = 's32[1]{0}', space=sflag, size = 0x4, scoped, tag = 'scoped memory for tpu_custom_call.1']
    #allocation8 [shape = 'u8[8192]{0}', space=vmem, size = 0x2000, scoped, tag = 'output window, operand 0, single buffered']
    %8 = vsyncpa [#allocation4], 0
    %9 = vsyncpa [#allocation7], 0
    %10 = vsyncpa [#allocation5], 0
    // Predicated region
    $region2: #{tpu_custom_call.1} parent=1 // pred_check
      _
    $region3: #{tpu_custom_call.1} parent=1 // pred_check_branch
      %12 = sbr.rel (0) target = $region5
    $region4: #{tpu_custom_call.1} parent=1 // pred_region
      %s14 = ssub.s32 256, 256
      %15 = vsyncadd [#allocation4], %s14
      %s16 = sshll.u32 [#allocation3], 4
      %s17 = int_to_ptr.vmem [resolvable:$true] %s16
      %22 = dma.hbm_to_vmem [thread:$0]  %s0, 256, %s17, [#allocation4], 128, 128, 8
    $region5: #{tpu_custom_call.1} parent=1 // pred_fallthru
      _
    // Predicated region
    $region6: #{tpu_custom_call.1} parent=1 // pred_check
      _
    $region7: #{tpu_custom_call.1} parent=1 // pred_check_branch
      %24 = sbr.rel (0) target = $region9
    $region8: #{tpu_custom_call.1} parent=1 // pred_region
      %s26 = ssub.s32 512, 512
      %27 = vsyncadd [#allocation7], %s26
      %s28 = sshll.u32 [#allocation6], 4
      %s29 = int_to_ptr.vmem [resolvable:$true] %s28
      %34 = dma.hbm_to_vmem [thread:$0]  %s1, 512, %s29, [#allocation7], 128, 128, 8
    $region9: #{tpu_custom_call.1} parent=1 // pred_fallthru
      _
    // Predicated region
    $region10: #{tpu_custom_call.1} parent=1 // pred_check
      _
    $region11: #{tpu_custom_call.1} parent=1 // pred_check_branch
      %36 = sbr.rel (0) target = $region13
    $region12: #{tpu_custom_call.1} parent=1 // pred_region
      _
    $region13: #{tpu_custom_call.1} parent=1 // pred_fallthru
      _
    // Predicated region
    $region14: #{tpu_custom_call.1} parent=1 // pred_check
      _
    $region15: #{tpu_custom_call.1} parent=1 // pred_check_branch
      %38 = sbr.rel (0) target = $region17
    $region16: #{tpu_custom_call.1} parent=1 // pred_region
      %39 = dma.done [#allocation4], 256
    $region17: #{tpu_custom_call.1} parent=1 // pred_fallthru
      _
    // Predicated region
    $region18: #{tpu_custom_call.1} parent=1 // pred_check
      _
    $region19: #{tpu_custom_call.1} parent=1 // pred_check_branch
      %41 = sbr.rel (0) target = $region21
    $region20: #{tpu_custom_call.1} parent=1 // pred_region
      %42 = dma.done [#allocation7], 512
    $region21: #{tpu_custom_call.1} parent=1 // pred_fallthru
      _
    %p43 = scmp.eq.s32.totalorder 0, 0
    // Predicated region
    $region22: #{tpu_custom_call.1} parent=1 // pred_check
      %p44 = pneg %p43
    $region23: #{tpu_custom_call.1} parent=1 // pred_check_branch
      %46 = sbr.rel (%p44) target = $region25
    $region24: #{tpu_custom_call.1} parent=1 // pred_region
      %vm47 = vcmask 261120
      %48 = vst.msk [vmem:[#allocation2] sm:$0xff] %vm47, 0.0
      %49 = vst.msk [vmem:[#allocation2 + $0x8] sm:$0xff] %vm47, 0.0
    $region25: #{tpu_custom_call.1} parent=1 // pred_fallthru
      _
    %v50 = vld [vmem:[#allocation2] sm:$0xff]
    %v51 = vld [vmem:[#allocation2 + $0x8] sm:$0xff]
    %v52 = vld [vmem:[#allocation3] sm:$0xff]
    %v53 = vld [vmem:[#allocation3 + $0x8] sm:$0xff]
    %v54 = vld [vmem:[#allocation6] sm:$0xff]
    %v55 = vld [vmem:[#allocation6 + $0x8] sm:$0xff]
    %v56 = vld [vmem:[#allocation6 + $0x10] sm:$0xff]
    %v57 = vld [vmem:[#allocation6 + $0x18] sm:$0xff]
    %vm58 = vcmask 261120
    %v60 = vsel %vm58, %v52, 0
    %v63 = vsel %vm58, %v53, 0
    %65 = vmatprep.subr.mxu0 0.0
    %66 = vmatpush1.msra.mxu0 0.0
    %67 = vmatprep.subr.mxu0 0.0
    %68 = vmatpush1.msra.mxu0 0.0
    %69 = vmatprep.subr.mxu0 0.0
    %70 = vmatpush1.msra.mxu0 0.0
    %71 = vmatprep.subr.mxu0 0.0
    %72 = vmatpush1.msra.mxu0 0.0
    %73 = vmatprep.subr.mxu0 0.0
    %74 = vmatpush1.msra.mxu0 0.0
    %75 = vmatprep.subr.mxu0 0.0
    %76 = vmatpush1.msra.mxu0 0.0
    %77 = vmatprep.subr.mxu0 0.0
    %78 = vmatpush1.msra.mxu0 0.0
    %79 = vmatprep.subr.mxu0 0.0
    %80 = vmatpush1.msra.mxu0 0.0
    %81 = vmatprep.subr.mxu0 0.0
    %82 = vmatpush1.msra.mxu0 0.0
    %83 = vmatprep.subr.mxu0 0.0
    %84 = vmatpush1.msra.mxu0 0.0
    %85 = vmatprep.subr.mxu0 0.0
    %86 = vmatpush1.msra.mxu0 0.0
    %87 = vmatprep.subr.mxu0 0.0
    %88 = vmatpush1.msra.mxu0 0.0
    %89 = vmatprep.subr.mxu0 0.0
    %90 = vmatpush1.msra.mxu0 %v57
    %91 = vmatprep.subr.mxu0 0.0
    %92 = vmatpush1.msra.mxu0 %v56
    %93 = vmatprep.subr.mxu0 0.0
    %94 = vmatpush1.msra.mxu0 %v55
    %95 = vmatprep.subr.mxu0 0.0
    %96 = vmatpush1.msra.mxu0 %v54
    %97 = vmatprep.subr.mxu0 0.0
    %98 = vmatpush2.msra.mxu0 0.0
    %99 = vmatprep.subr.mxu0 0.0
    %100 = vmatpush2.msra.mxu0 0.0
    %101 = vmatprep.subr.mxu0 0.0
    %102 = vmatpush2.msra.mxu0 0.0
    %103 = vmatprep.subr.mxu0 0.0
    %104 = vmatpush2.msra.mxu0 0.0
    %105 = vmatprep.subr.mxu0 0.0
    %106 = vmatpush2.msra.mxu0 0.0
    %107 = vmatprep.subr.mxu0 0.0
    %108 = vmatpush2.msra.mxu0 0.0
    %109 = vmatprep.subr.mxu0 0.0
    %110 = vmatpush2.msra.mxu0 0.0
    %111 = vmatprep.subr.mxu0 0.0
    %112 = vmatpush2.msra.mxu0 0.0
    %113 = vmatprep.subr.mxu0 0.0
    %114 = vmatpush2.msra.mxu0 0.0
    %115 = vmatprep.subr.mxu0 0.0
    %116 = vmatpush2.msra.mxu0 0.0
    %117 = vmatprep.subr.mxu0 0.0
    %118 = vmatpush2.msra.mxu0 0.0
    %119 = vmatprep.subr.mxu0 0.0
    %120 = vmatpush2.msra.mxu0 0.0
    %121 = vmatprep.subr.mxu0 0.0
    %122 = vmatpush2.msra.mxu0 0.0
    %123 = vmatprep.subr.mxu0 0.0
    %124 = vmatpush2.msra.mxu0 0.0
    %125 = vmatprep.subr.mxu0 0.0
    %126 = vmatpush2.msra.mxu0 0.0
    %127 = vmatprep.subr.mxu0 0.0
    %128 = vmatpush2.msra.mxu0 0.0
    %129 = vmatprep.mubr.f32.mxu0 0.0
    %130 = vmatmul.mubr.f32.gmra.mxu0 %v60
    %v131 = vpop.f32.mrf.mxu0
    %v132 = vadd.f32 0.0, %v131
    %v133 = vpop.f32.mrf.mxu0
    %134 = vmatprep.mubr.f32.mxu0 0.0
    %135 = vmatmul.mubr.f32.gmra.mxu0 %v63
    %v136 = vpop.f32.mrf.mxu0
    %v137 = vadd.f32 0.0, %v136
    %v138 = vpop.f32.mrf.mxu0
    %139 = vdwg.mxu0
    %v140 = vadd.f32 %v50, %v132
    %v141 = vadd.f32 %v51, %v137
    %142 = vst.msk [vmem:[#allocation2] sm:$0xff] %vm58, %v140
    %143 = vst.msk [vmem:[#allocation2 + $0x8] sm:$0xff] %vm58, %v141
    // Predicated region
    $region26: #{tpu_custom_call.1} parent=1 // pred_check
      %p144 = pneg %p43
    $region27: #{tpu_custom_call.1} parent=1 // pred_check_branch
      %146 = sbr.rel (%p144) target = $region29
    $region28: #{tpu_custom_call.1} parent=1 // pred_region
      %v147 = vld [vmem:[#allocation2] sm:$0xff]
      %v148 = vld [vmem:[#allocation2 + $0x8] sm:$0xff]
      %v149 = vld [vmem:[%s2] sm:$0x1]
      %v151 = vlaneseq
      %v152 = vshrl.u32 %v151, 7
      %v153 = vsub.s32 0, %v152
      %v154 = vrot.slane %v149, %v153
      %v156 = vadd.f32 %v147, %v154
      %v157 = vadd.f32 %v148, %v154
      %158 = vst.msk [vmem:[#allocation8] sm:$0xff] %vm58, %v156
      %159 = vst.msk [vmem:[#allocation8 + $0x8] sm:$0xff] %vm58, %v157
    $region29: #{tpu_custom_call.1} parent=1 // pred_fallthru
      _
    // Predicated region
    $region30: #{tpu_custom_call.1} parent=1 // pred_check
      _
    $region31: #{tpu_custom_call.1} parent=1 // pred_check_branch
      %161 = sbr.rel (0) target = $region33
    $region32: #{tpu_custom_call.1} parent=1 // pred_region
      %s163 = ssub.s32 256, 256
      %164 = vsyncadd [#allocation5], %s163
      %s165 = sshll.u32 [#allocation8], 4
      %s166 = int_to_ptr.vmem [resolvable:$true] %s165
      %171 = dma.vmem_to_hbm [thread:$0]  %s166, 256, %s3, [#allocation5], 128, 128, 8
    $region33: #{tpu_custom_call.1} parent=1 // pred_fallthru
      _
    // Predicated region
    $region34: #{tpu_custom_call.1} parent=1 // pred_check
      _
    $region35: #{tpu_custom_call.1} parent=1 // pred_check_branch
      %173 = sbr.rel (0) target = $region37
    $region36: #{tpu_custom_call.1} parent=1 // pred_region
      %174 = dma.done [#allocation5], 256
    $region37: #{tpu_custom_call.1} parent=1 // pred_fallthru
      _
    %175 = vsyncpa [#allocation4], 1
    %176 = vsyncpa [#allocation7], 1
    %177 = vsyncpa [#allocation5], 1

</llo_original>
